<compile_context>
chip_gen: v7x
topology: tpu7x:2x2x1
jax: 0.10.0
libtpu: 0.0.40
codegen_flags: <defaults>
</compile_context>

<pallas_src>
import functools

import jax
import jax.numpy as jnp
from jax.experimental import pallas as pl
from jax.experimental.pallas import tpu as pltpu


def _round_up(x, m):
    return (x + m - 1) // m * m


def _prenorm_linear_kernel(x_ref, g_ref, b_ref, w_ref, wb_ref, o_ref, *, eps):
    """Fused LayerNorm(D) -> Linear(D, D_out) over a [TM, D] row tile."""
    x = x_ref[...].astype(jnp.float32)                         # [TM, D]
    # LayerNorm over last axis (biased variance, matches torch.nn.LayerNorm).
    mean = jnp.mean(x, axis=-1, keepdims=True)                  # [TM, 1]
    centered = x - mean
    var = jnp.mean(centered * centered, axis=-1, keepdims=True)
    xhat = centered * jax.lax.rsqrt(var + eps)                  # [TM, D]
    y = xhat * g_ref[...].astype(jnp.float32) + b_ref[...].astype(jnp.float32)
    # fn = Linear(D, D_out): feed the MXU operands in the weight dtype (bf16 when
    # the weights are bf16) with f32 accumulation.
    y = y.astype(w_ref.dtype)
    out = jnp.dot(y, w_ref[...], preferred_element_type=jnp.float32)
    out = out + wb_ref[...].astype(jnp.float32)
    o_ref[...] = out.astype(o_ref.dtype)


def prenorm_linear(x, gamma, beta, w, w_bias, *, eps=1e-5, block_m=512):
    """PreNorm(dim, Linear(dim, d_out)) forward: fn(LayerNorm(x)).

    x:      [B, N, D]
    gamma:  [D]        LayerNorm weight
    beta:   [D]        LayerNorm bias
    w:      [D, D_out] Linear weight (row-major matmul form, i.e. torch weight.T)
    w_bias: [D_out]    Linear bias
    returns [B, N, D_out]
    """
    B, N, D = x.shape
    D_out = w.shape[1]
    M = B * N

    x2d = x.reshape(M, D)
    gamma2d = gamma.reshape(1, D)
    beta2d = beta.reshape(1, D)
    wb2d = w_bias.reshape(1, D_out)

    # Large row tile (sublane-aligned), capped so 2x double-buffered
    # (TM*D + TM*D_out) activations plus the resident weight stay well inside the
    # scoped VMEM limit on every generation. Pallas masks the ragged last block.
    tm = min(block_m, _round_up(M, 8))
    grid_m = pl.cdiv(M, tm)

    x_bytes = x.dtype.itemsize
    w_bytes = w.dtype.itemsize
    cost = pl.CostEstimate(
        flops=2 * M * D * D_out + 8 * M * D,
        transcendentals=M,  # one rsqrt per row
        bytes_accessed=(M * D + M * D_out) * x_bytes
        + (D * D_out + D_out) * w_bytes
        + 2 * D * gamma.dtype.itemsize,
    )

    kernel = functools.partial(_prenorm_linear_kernel, eps=eps)

    out2d = pl.pallas_call(
        kernel,
        out_shape=jax.ShapeDtypeStruct((M, D_out), x.dtype),
        grid_spec=pltpu.PrefetchScalarGridSpec(
            num_scalar_prefetch=0,
            grid=(grid_m,),
            in_specs=[
                pl.BlockSpec((tm, D), lambda i: (i, 0)),        # x row tile
                pl.BlockSpec((1, D), lambda i: (0, 0)),         # gamma (resident)
                pl.BlockSpec((1, D), lambda i: (0, 0)),         # beta  (resident)
                pl.BlockSpec((D, D_out), lambda i: (0, 0)),     # W     (resident)
                pl.BlockSpec((1, D_out), lambda i: (0, 0)),     # bias  (resident)
            ],
            out_specs=pl.BlockSpec((tm, D_out), lambda i: (i, 0)),
        ),
        compiler_params=pltpu.CompilerParams(
            dimension_semantics=("parallel",),
        ),
        cost_estimate=cost,
    )(x2d, gamma2d, beta2d, w, wb2d)

    return out2d.reshape(B, N, D_out)


def _reference(x, gamma, beta, w, w_bias, eps=1e-5):
    xf = x.astype(jnp.float32)
    mean = jnp.mean(xf, axis=-1, keepdims=True)
    var = jnp.mean((xf - mean) ** 2, axis=-1, keepdims=True)
    y = (xf - mean) * jax.lax.rsqrt(var + eps) * gamma.astype(jnp.float32) \
        + beta.astype(jnp.float32)
    out = y @ w.astype(jnp.float32) + w_bias.astype(jnp.float32)
    return out


if __name__ == "__main__":
    key = jax.random.PRNGKey(0)
    # Small but (8,128)-aligned shapes: lane-dense output stores.
    B, N, D = 2, 8, 128          # batch, tokens, feature dim
    D_out = D                    # fn = Linear(dim, dim)

    kx, kw = jax.random.split(key)
    x = jax.random.normal(kx, (B, N, D), dtype=jnp.float32)

    # nn.LayerNorm default init: gamma=1, beta=0.
    gamma = jnp.ones((D,), dtype=jnp.float32)
    beta = jnp.zeros((D,), dtype=jnp.float32)
    w = jax.random.normal(kw, (D, D_out), dtype=jnp.float32) * 0.02
    w_bias = jnp.zeros((D_out,), dtype=jnp.float32)

    # f32 path: exact match vs reference.
    out = prenorm_linear(x, gamma, beta, w, w_bias)
    out = jax.block_until_ready(out)
    ref = _reference(x, gamma, beta, w, w_bias)
    assert out.shape == (B, N, D_out)
    assert jnp.allclose(out.astype(jnp.float32), ref, atol=1e-4, rtol=1e-4), \
        "f32 mismatch vs reference"

    # bf16 path (weights/activations in bf16, MXU bf16 inputs, f32 accumulation).
    x_bf = x.astype(jnp.bfloat16)
    w_bf = w.astype(jnp.bfloat16)
    wb_bf = w_bias.astype(jnp.bfloat16)
    out_bf = prenorm_linear(x_bf, gamma, beta, w_bf, wb_bf)
    out_bf = jax.block_until_ready(out_bf)
    ref_bf = _reference(x_bf, gamma, beta, w_bf, wb_bf)
    assert jnp.allclose(out_bf.astype(jnp.float32), ref_bf, atol=1e-1, rtol=1e-1), \
        "bf16 mismatch vs reference"

    print("KERNEL_OK")
</pallas_src>

<mosaic_0001>
module attributes {stable_mosaic.version = 11 : i64} {
  func.func @_prenorm_linear_kernel(%arg0: i32, %arg1: memref<16x128xf32, #tpu.memory_space<vmem>>, %arg2: memref<1x128xf32, #tpu.memory_space<vmem>>, %arg3: memref<1x128xf32, #tpu.memory_space<vmem>>, %arg4: memref<128x128xf32, #tpu.memory_space<vmem>>, %arg5: memref<1x128xf32, #tpu.memory_space<vmem>>, %arg6: memref<16x128xf32, #tpu.memory_space<vmem>>) attributes {dimension_semantics = [#tpu.dimension_semantics<parallel>], iteration_bounds = array<i64: 1>, scalar_prefetch = 0 : i64, scratch_operands = 0 : i64, tpu.core_type = #tpu.core_type<tc>, window_params = [{transform_indices = @transform_0, window_bounds = array<i64: 16, 128>}, {pipeline_mode = #tpu.pipeline_mode<synchronous>, transform_indices = @transform_1, window_bounds = array<i64: 1, 128>}, {pipeline_mode = #tpu.pipeline_mode<synchronous>, transform_indices = @transform_2, window_bounds = array<i64: 1, 128>}, {pipeline_mode = #tpu.pipeline_mode<synchronous>, transform_indices = @transform_3, window_bounds = array<i64: 128, 128>}, {pipeline_mode = #tpu.pipeline_mode<synchronous>, transform_indices = @transform_4, window_bounds = array<i64: 1, 128>}, {transform_indices = @transform_5, window_bounds = array<i64: 16, 128>}]} {
    %c0 = arith.constant 0 : index
    %c0_0 = arith.constant 0 : index
    %0 = vector.load %arg1[%c0, %c0_0] : memref<16x128xf32, #tpu.memory_space<vmem>>, vector<16x128xf32>
    %cst = arith.constant dense<0.000000e+00> : vector<16xf32>
    %1 = vector.multi_reduction <add>, %0, %cst [1] : vector<16x128xf32> to vector<16xf32>
    %2 = vector.shape_cast %1 : vector<16xf32> to vector<16x1xf32>
    %cst_1 = arith.constant 1.280000e+02 : f32
    %3 = vector.broadcast %cst_1 : f32 to vector<16x1xf32>
    %4 = arith.divf %2, %3 : vector<16x1xf32>
    %5 = vector.broadcast %4 : vector<16x1xf32> to vector<16x128xf32>
    %6 = arith.subf %0, %5 : vector<16x128xf32>
    %7 = arith.mulf %6, %6 : vector<16x128xf32>
    %cst_2 = arith.constant dense<0.000000e+00> : vector<16xf32>
    %8 = vector.multi_reduction <add>, %7, %cst_2 [1] : vector<16x128xf32> to vector<16xf32>
    %9 = vector.shape_cast %8 : vector<16xf32> to vector<16x1xf32>
    %cst_3 = arith.constant 1.280000e+02 : f32
    %10 = vector.broadcast %cst_3 : f32 to vector<16x1xf32>
    %11 = arith.divf %9, %10 : vector<16x1xf32>
    %cst_4 = arith.constant 9.99999974E-6 : f32
    %12 = vector.broadcast %cst_4 : f32 to vector<16x1xf32>
    %13 = arith.addf %11, %12 : vector<16x1xf32>
    %14 = math.rsqrt %13 : vector<16x1xf32>
    %15 = vector.broadcast %14 : vector<16x1xf32> to vector<16x128xf32>
    %16 = arith.mulf %6, %15 : vector<16x128xf32>
    %c0_5 = arith.constant 0 : index
    %c0_6 = arith.constant 0 : index
    %17 = vector.load %arg2[%c0_5, %c0_6] : memref<1x128xf32, #tpu.memory_space<vmem>>, vector<1x128xf32>
    %18 = vector.broadcast %17 : vector<1x128xf32> to vector<16x128xf32>
    %19 = arith.mulf %16, %18 : vector<16x128xf32>
    %c0_7 = arith.constant 0 : index
    %c0_8 = arith.constant 0 : index
    %20 = vector.load %arg3[%c0_7, %c0_8] : memref<1x128xf32, #tpu.memory_space<vmem>>, vector<1x128xf32>
    %21 = vector.broadcast %20 : vector<1x128xf32> to vector<16x128xf32>
    %22 = arith.addf %19, %21 : vector<16x128xf32>
    %c0_9 = arith.constant 0 : index
    %c0_10 = arith.constant 0 : index
    %23 = vector.load %arg4[%c0_9, %c0_10] : memref<128x128xf32, #tpu.memory_space<vmem>>, vector<128x128xf32>
    %cst_11 = arith.constant dense<0.000000e+00> : vector<16x128xf32>
    %24 = tpu.matmul %22, %23, %cst_11 {dimension_numbers = #tpu.dot_dimension_numbers<[1], [0], [0], [1], [0, 0, 1, 1], [], []>} : vector<16x128xf32>, vector<128x128xf32>, vector<16x128xf32> -> vector<16x128xf32>
    %c0_12 = arith.constant 0 : index
    %c0_13 = arith.constant 0 : index
    %25 = vector.load %arg5[%c0_12, %c0_13] : memref<1x128xf32, #tpu.memory_space<vmem>>, vector<1x128xf32>
    %26 = vector.broadcast %25 : vector<1x128xf32> to vector<16x128xf32>
    %27 = arith.addf %24, %26 : vector<16x128xf32>
    %c0_14 = arith.constant 0 : index
    %c0_15 = arith.constant 0 : index
    %28 = vector.load %arg6[%c0_14, %c0_15] : memref<16x128xf32, #tpu.memory_space<vmem>>, vector<16x128xf32>
    tpu.vector_store %arg6[%c0_14, %c0_15], %27 {strides = array<i32>} : memref<16x128xf32, #tpu.memory_space<vmem>>, vector<16x128xf32>,
    return
  }
  func.func @transform_0(%arg0: i32) -> (i32, i32) {
    %c0_i32 = arith.constant 0 : i32
    %c0_i32_0 = arith.constant 0 : i32
    return %arg0, %c0_i32 : i32, i32
  }
  func.func @transform_1(%arg0: i32) -> (i32, i32) {
    %c0_i32 = arith.constant 0 : i32
    %c0_i32_0 = arith.constant 0 : i32
    %c0_i32_1 = arith.constant 0 : i32
    return %c0_i32, %c0_i32_0 : i32, i32
  }
  func.func @transform_2(%arg0: i32) -> (i32, i32) {
    %c0_i32 = arith.constant 0 : i32
    %c0_i32_0 = arith.constant 0 : i32
    %c0_i32_1 = arith.constant 0 : i32
    return %c0_i32, %c0_i32_0 : i32, i32
  }
  func.func @transform_3(%arg0: i32) -> (i32, i32) {
    %c0_i32 = arith.constant 0 : i32
    %c0_i32_0 = arith.constant 0 : i32
    %c0_i32_1 = arith.constant 0 : i32
    return %c0_i32, %c0_i32_0 : i32, i32
  }
  func.func @transform_4(%arg0: i32) -> (i32, i32) {
    %c0_i32 = arith.constant 0 : i32
    %c0_i32_0 = arith.constant 0 : i32
    %c0_i32_1 = arith.constant 0 : i32
    return %c0_i32, %c0_i32_0 : i32, i32
  }
  func.func @transform_5(%arg0: i32) -> (i32, i32) {
    %c0_i32 = arith.constant 0 : i32
    %c0_i32_0 = arith.constant 0 : i32
    return %arg0, %c0_i32 : i32, i32
  }
}

</mosaic_0001>

<llo_original>
// kernel: tpu_custom_call.1
$region0: #{tpu_custom_call.1}
  #allocation0 [shape = 'u32[]', space=smem, size = 0x4, offset = 0x4, fixed_abs, tag = 'smem constant byte address 0x4 - core index']
  #allocation1 [shape = 'u32[144,128]{1,0:T(1,128)}', space=vmem, size = 0x12000, scoped, tag = 'internal scratch']
  %s0 = inlined_call_operand.hbm [shape: f32[16,128], index: 0, kind: input, shape index: {}]
  %s1 = inlined_call_operand.vmem [shape: f32[1,128], index: 1, kind: input, shape index: {}]
  %s2 = inlined_call_operand.vmem [shape: f32[1,128], index: 2, kind: input, shape index: {}]
  %s3 = inlined_call_operand.hbm [shape: f32[128,128], index: 3, kind: input, shape index: {}]
  %s4 = inlined_call_operand.vmem [shape: f32[1,128], index: 4, kind: input, shape index: {}]
  %s5 = inlined_call_operand.hbm [shape: f32[16,128], index: 5, kind: output, shape index: {}]
  %s6 = sld [smem:[#allocation0]]
  $region38: #{tpu_custom_call.1} parent=0
    _
  %s8 = ssub.s32 1, %s6
  %s9 = scalar_select 0, %s8, %s6
  $region1: #{tpu_custom_call.1} parent=0
    #allocation2 [shape = 'u8[8192]{0}', space=vmem, size = 0x2000, scoped, tag = 'input window, operand 0, single buffered']
    #allocation3 [shape = 's32[1]{0}', space=sflag, size = 0x4, scoped, tag = 'scoped memory for tpu_custom_call.1']
    #allocation4 [shape = 's32[1]{0}', space=sflag, size = 0x4, scoped, tag = 'scoped memory for tpu_custom_call.1']
    #allocation5 [shape = 'u8[65536]{0}', space=vmem, size = 0x10000, scoped, tag = 'input window, operand 3, single buffered']
    #allocation6 [shape = 's32[1]{0}', space=sflag, size = 0x4, scoped, tag = 'scoped memory for tpu_custom_call.1']
    #allocation7 [shape = 'u8[8192]{0}', space=vmem, size = 0x2000, scoped, tag = 'output window, operand 0, single buffered']
    %10 = vsyncpa [#allocation3], 0
    %11 = vsyncpa [#allocation6], 0
    %12 = vsyncpa [#allocation4], 0
    // Predicated region
    $region2: #{tpu_custom_call.1} parent=1 // pred_check
      _
    $region3: #{tpu_custom_call.1} parent=1 // pred_check_branch
      %14 = sbr.rel (0) target = $region5
    $region4: #{tpu_custom_call.1} parent=1 // pred_region
      %s16 = ssub.s32 256, 256
      %17 = vsyncadd [#allocation3], %s16
      %s18 = sshll.u32 [#allocation2], 4
      %s19 = int_to_ptr.vmem [resolvable:$true] %s18
      %24 = dma.hbm_to_vmem [thread:$0]  %s0, 256, %s19, [#allocation3], 128, 128, 8
    $region5: #{tpu_custom_call.1} parent=1 // pred_fallthru
      _
    // Predicated region
    $region6: #{tpu_custom_call.1} parent=1 // pred_check
      _
    $region7: #{tpu_custom_call.1} parent=1 // pred_check_branch
      %26 = sbr.rel (0) target = $region9
    $region8: #{tpu_custom_call.1} parent=1 // pred_region
      _
    $region9: #{tpu_custom_call.1} parent=1 // pred_fallthru
      _
    // Predicated region
    $region10: #{tpu_custom_call.1} parent=1 // pred_check
      _
    $region11: #{tpu_custom_call.1} parent=1 // pred_check_branch
      %28 = sbr.rel (0) target = $region13
    $region12: #{tpu_custom_call.1} parent=1 // pred_region
      _
    $region13: #{tpu_custom_call.1} parent=1 // pred_fallthru
      _
    // Predicated region
    $region14: #{tpu_custom_call.1} parent=1 // pred_check
      _
    $region15: #{tpu_custom_call.1} parent=1 // pred_check_branch
      %30 = sbr.rel (0) target = $region17
    $region16: #{tpu_custom_call.1} parent=1 // pred_region
      %s32 = ssub.s32 2048, 2048
      %33 = vsyncadd [#allocation6], %s32
      %s34 = sshll.u32 [#allocation5], 4
      %s35 = int_to_ptr.vmem [resolvable:$true] %s34
      %40 = dma.hbm_to_vmem [thread:$0]  %s3, 2048, %s35, [#allocation6], 128, 128, 8
    $region17: #{tpu_custom_call.1} parent=1 // pred_fallthru
      _
    // Predicated region
    $region18: #{tpu_custom_call.1} parent=1 // pred_check
      _
    $region19: #{tpu_custom_call.1} parent=1 // pred_check_branch
      %42 = sbr.rel (0) target = $region21
    $region20: #{tpu_custom_call.1} parent=1 // pred_region
      _
    $region21: #{tpu_custom_call.1} parent=1 // pred_fallthru
      _
    // Predicated region
    $region22: #{tpu_custom_call.1} parent=1 // pred_check
      _
    $region23: #{tpu_custom_call.1} parent=1 // pred_check_branch
      %44 = sbr.rel (0) target = $region25
    $region24: #{tpu_custom_call.1} parent=1 // pred_region
      %45 = dma.done [#allocation3], 256
    $region25: #{tpu_custom_call.1} parent=1 // pred_fallthru
      _
    // Predicated region
    $region26: #{tpu_custom_call.1} parent=1 // pred_check
      _
    $region27: #{tpu_custom_call.1} parent=1 // pred_check_branch
      %47 = sbr.rel (0) target = $region29
    $region28: #{tpu_custom_call.1} parent=1 // pred_region
      %48 = dma.done [#allocation6], 2048
    $region29: #{tpu_custom_call.1} parent=1 // pred_fallthru
      _
    %v49 = vld [vmem:[#allocation2] sm:$0xff]
    %v50 = vld [vmem:[#allocation2 + $0x8] sm:$0xff]
    %51 = vadd.xlane.f32.xlu0 %v49
    %v52 = vpop.xlane.xlu0 %51
    %53 = vadd.xlane.f32.xlu0 %v50
    %v54 = vpop.xlane.xlu0 %53
    %v55 = vrcp.pop 128.0
    %v56 = vmul.f32 %v52, %v55
    %v57 = vmul.f32 %v54, %v55
    %v58 = vsub.f32 %v49, %v56
    %v59 = vsub.f32 %v50, %v57
    %v60 = vmul.f32 %v58, %v58
    %v61 = vmul.f32 %v59, %v59
    %62 = vadd.xlane.f32.xlu0 %v60
    %v63 = vpop.xlane.xlu0 %62
    %64 = vadd.xlane.f32.xlu0 %v61
    %v65 = vpop.xlane.xlu0 %64
    %v66 = vmul.f32 %v63, %v55
    %v67 = vmul.f32 %v65, %v55
    %v68 = vadd.f32 %v66, 1e-05
    %v69 = vadd.f32 %v67, 1e-05
    %v70 = vrsqrt.pop %v68
    %v71 = vrsqrt.pop %v69
    %v72 = vmul.f32 %v58, %v70
    %v73 = vmul.f32 %v59, %v71
    %v74 = vld [vmem:[%s1] sm:$0x1]
    %v76 = vlaneseq
    %v77 = vshrl.u32 %v76, 7
    %v78 = vsub.s32 0, %v77
    %v79 = vrot.slane %v74, %v78
    %v81 = vmul.f32 %v72, %v79
    %v82 = vmul.f32 %v73, %v79
    %v83 = vld [vmem:[%s2] sm:$0x1]
    %v85 = vlaneseq
    %v86 = vshrl.u32 %v85, 7
    %v87 = vsub.s32 0, %v86
    %v88 = vrot.slane %v83, %v87
    %v90 = vadd.f32 %v81, %v88
    %v91 = vadd.f32 %v82, %v88
    %v92 = vld [vmem:[#allocation5] sm:$0xff]
    %v93 = vld [vmem:[#allocation5 + $0x8] sm:$0xff]
    %v94 = vld [vmem:[#allocation5 + $0x10] sm:$0xff]
    %v95 = vld [vmem:[#allocation5 + $0x18] sm:$0xff]
    %v96 = vld [vmem:[#allocation5 + $0x20] sm:$0xff]
    %v97 = vld [vmem:[#allocation5 + $0x28] sm:$0xff]
    %v98 = vld [vmem:[#allocation5 + $0x30] sm:$0xff]
    %v99 = vld [vmem:[#allocation5 + $0x38] sm:$0xff]
    %v100 = vld [vmem:[#allocation5 + $0x40] sm:$0xff]
    %v101 = vld [vmem:[#allocation5 + $0x48] sm:$0xff]
    %v102 = vld [vmem:[#allocation5 + $0x50] sm:$0xff]
    %v103 = vld [vmem:[#allocation5 + $0x58] sm:$0xff]
    %v104 = vld [vmem:[#allocation5 + $0x60] sm:$0xff]
    %v105 = vld [vmem:[#allocation5 + $0x68] sm:$0xff]
    %v106 = vld [vmem:[#allocation5 + $0x70] sm:$0xff]
    %v107 = vld [vmem:[#allocation5 + $0x78] sm:$0xff]
    %v108 = vld [vmem:[%s4] sm:$0x1]
    %v110 = vlaneseq
    %v111 = vshrl.u32 %v110, 7
    %v112 = vsub.s32 0, %v111
    %v113 = vrot.slane %v108, %v112
    %115 = vmatprep.subr.mxu0 0.0
    %116 = vmatpush1.msra.mxu0 %v92
    %117 = vmatprep.subr.mxu0 0.0
    %118 = vmatpush1.msra.mxu0 %v93
    %119 = vmatprep.subr.mxu0 0.0
    %120 = vmatpush1.msra.mxu0 %v94
    %121 = vmatprep.subr.mxu0 0.0
    %122 = vmatpush1.msra.mxu0 %v95
    %123 = vmatprep.subr.mxu0 0.0
    %124 = vmatpush1.msra.mxu0 %v96
    %125 = vmatprep.subr.mxu0 0.0
    %126 = vmatpush1.msra.mxu0 %v97
    %127 = vmatprep.subr.mxu0 0.0
    %128 = vmatpush1.msra.mxu0 %v98
    %129 = vmatprep.subr.mxu0 0.0
    %130 = vmatpush1.msra.mxu0 %v99
    %131 = vmatprep.subr.mxu0 0.0
    %132 = vmatpush1.msra.mxu0 %v100
    %133 = vmatprep.subr.mxu0 0.0
    %134 = vmatpush1.msra.mxu0 %v101
    %135 = vmatprep.subr.mxu0 0.0
    %136 = vmatpush1.msra.mxu0 %v102
    %137 = vmatprep.subr.mxu0 0.0
    %138 = vmatpush1.msra.mxu0 %v103
    %139 = vmatprep.subr.mxu0 0.0
    %140 = vmatpush1.msra.mxu0 %v104
    %141 = vmatprep.subr.mxu0 0.0
    %142 = vmatpush1.msra.mxu0 %v105
    %143 = vmatprep.subr.mxu0 0.0
    %144 = vmatpush1.msra.mxu0 %v106
    %145 = vmatprep.subr.mxu0 0.0
    %146 = vmatpush1.msra.mxu0 %v107
    %147 = vmatprep.subr.mxu0 0.0
    %148 = vmatpush1.msra.mxu0 0.0
    %149 = vmatprep.subr.mxu0 0.0
    %150 = vmatpush1.msra.mxu0 0.0
    %151 = vmatprep.subr.mxu0 0.0
    %152 = vmatpush1.msra.mxu0 0.0
    %153 = vmatprep.subr.mxu0 0.0
    %154 = vmatpush1.msra.mxu0 0.0
    %155 = vmatprep.subr.mxu0 0.0
    %156 = vmatpush1.msra.mxu0 0.0
    %157 = vmatprep.subr.mxu0 0.0
    %158 = vmatpush1.msra.mxu0 0.0
    %159 = vmatprep.subr.mxu0 0.0
    %160 = vmatpush1.msra.mxu0 0.0
    %161 = vmatprep.subr.mxu0 0.0
    %162 = vmatpush1.msra.mxu0 0.0
    %163 = vmatprep.subr.mxu0 0.0
    %164 = vmatpush1.msra.mxu0 0.0
    %165 = vmatprep.subr.mxu0 0.0
    %166 = vmatpush1.msra.mxu0 0.0
    %167 = vmatprep.subr.mxu0 0.0
    %168 = vmatpush1.msra.mxu0 0.0
    %169 = vmatprep.subr.mxu0 0.0
    %170 = vmatpush1.msra.mxu0 0.0
    %171 = vmatprep.subr.mxu0 0.0
    %172 = vmatpush1.msra.mxu0 0.0
    %173 = vmatprep.subr.mxu0 0.0
    %174 = vmatpush1.msra.mxu0 0.0
    %175 = vmatprep.subr.mxu0 0.0
    %176 = vmatpush1.msra.mxu0 0.0
    %177 = vmatprep.subr.mxu0 0.0
    %178 = vmatpush1.msra.mxu0 0.0
    %179 = vmatprep.mubr.f32.mxu0 0.0
    %180 = vmatmul.mubr.f32.gmra.mrb[0].mxu0 %v90
    %v181 = vpop.f32.mrb[0].mxu0
    %v182 = vadd.f32 %v113, %v181
    %v183 = vpop.f32.mrb[0].mxu0
    %184 = vmatprep.mubr.f32.mxu0 0.0
    %185 = vmatmul.mubr.f32.gmra.mrb[0].mxu0 %v91
    %v186 = vpop.f32.mrb[0].mxu0
    %v187 = vadd.f32 %v113, %v186
    %v188 = vpop.f32.mrb[0].mxu0
    %189 = vdwg.mxu0
    %190 = vst [vmem:[#allocation7] sm:$0xff] %v182
    %191 = vst [vmem:[#allocation7 + $0x8] sm:$0xff] %v187
    // Predicated region
    $region30: #{tpu_custom_call.1} parent=1 // pred_check
      _
    $region31: #{tpu_custom_call.1} parent=1 // pred_check_branch
      %193 = sbr.rel (0) target = $region33
    $region32: #{tpu_custom_call.1} parent=1 // pred_region
      %s195 = ssub.s32 256, 256
      %196 = vsyncadd [#allocation4], %s195
      %s197 = sshll.u32 [#allocation7], 4
      %s198 = int_to_ptr.vmem [resolvable:$true] %s197
      %203 = dma.vmem_to_hbm [thread:$0]  %s198, 256, %s5, [#allocation4], 128, 128, 8
    $region33: #{tpu_custom_call.1} parent=1 // pred_fallthru
      _
    // Predicated region
    $region34: #{tpu_custom_call.1} parent=1 // pred_check
      _
    $region35: #{tpu_custom_call.1} parent=1 // pred_check_branch
      %205 = sbr.rel (0) target = $region37
    $region36: #{tpu_custom_call.1} parent=1 // pred_region
      %206 = dma.done [#allocation4], 256
    $region37: #{tpu_custom_call.1} parent=1 // pred_fallthru
      _
    %207 = vsyncpa [#allocation3], 1
    %208 = vsyncpa [#allocation6], 1
    %209 = vsyncpa [#allocation4], 1

</llo_original>
